<compile_context>
chip_gen: v7x
topology: tpu7x:2x2x1
jax: 0.10.0
libtpu: 0.0.40
codegen_flags: <defaults>
</compile_context>

<pallas_src>
import jax
import jax.numpy as jnp
from jax.experimental import pallas as pl
from jax.experimental.pallas import tpu as pltpu


def _dma_identity_kernel(x_hbm_ref, o_hbm_ref, sem):
    # One whole-array HBM->HBM async copy; no VMEM staging, no grid loop.
    cp = pltpu.make_async_copy(x_hbm_ref, o_hbm_ref, sem)
    cp.start()
    cp.wait()


def no_transform(x: jax.Array) -> jax.Array:
    """Exact semantics of NoTransform.forward: return `sample` unchanged.

    Zero-copy / zero-HBM-traffic path (preferred)."""
    return x


@jax.jit
def no_transform_pallas(x: jax.Array) -> jax.Array:
    """Identity implemented as a single HBM->HBM DMA Pallas kernel, for call
    sites that require an explicit kernel launch."""
    n = x.size
    if n == 0:
        return x

    itemsize = jnp.dtype(x.dtype).itemsize
    return pl.pallas_call(
        _dma_identity_kernel,
        out_shape=jax.ShapeDtypeStruct(x.shape, x.dtype),
        in_specs=[pl.BlockSpec(memory_space=pl.ANY)],
        out_specs=pl.BlockSpec(memory_space=pl.ANY),
        scratch_shapes=[pltpu.SemaphoreType.DMA],
        cost_estimate=pl.CostEstimate(
            flops=0,
            transcendentals=0,
            bytes_accessed=2 * n * itemsize,
        ),
    )(x)


if __name__ == "__main__":
    key = jax.random.PRNGKey(0)
    # NCHW "sample" tensor (small, deterministic).
    x = jax.random.normal(key, (2, 4, 16, 16), dtype=jnp.float32)

    # Preferred path: true identity, no kernel, no HBM traffic.
    y = no_transform(x)
    y = jax.block_until_ready(y)
    assert y.shape == x.shape and y.dtype == x.dtype
    assert bool(jnp.all(y == x))

    # Explicit Pallas kernel path: single HBM->HBM DMA, bit-exact copy.
    y_k = no_transform_pallas(x)
    y_k = jax.block_until_ready(y_k)
    assert y_k.shape == x.shape and y_k.dtype == x.dtype
    assert bool(jnp.all(y_k == x))

    print("KERNEL_OK")
</pallas_src>

<mosaic_0001>
module attributes {stable_mosaic.version = 11 : i64} {
  func.func @_dma_identity_kernel(%arg0: memref<2x4x16x16xf32, #tpu.memory_space<any>>, %arg1: memref<2x4x16x16xf32, #tpu.memory_space<any>>, %arg2: memref<!tpu.dma_semaphore, #tpu.memory_space<semaphore_mem>>) attributes {dimension_semantics = [], scalar_prefetch = 0 : i64, scratch_operands = 1 : i64, tpu.core_type = #tpu.core_type<tc>} {
    tpu.enqueue_dma source(%arg0 : memref<2x4x16x16xf32, #tpu.memory_space<any>>) target(%arg1 : memref<2x4x16x16xf32, #tpu.memory_space<any>>) target_semaphore(%arg2 : memref<!tpu.dma_semaphore, #tpu.memory_space<semaphore_mem>>)
    tpu.wait_dma2 semaphore(%arg2 : memref<!tpu.dma_semaphore, #tpu.memory_space<semaphore_mem>>) src(%arg0 : memref<2x4x16x16xf32, #tpu.memory_space<any>>) dst(%arg1 : memref<2x4x16x16xf32, #tpu.memory_space<any>>)
    return
  }
}

</mosaic_0001>

<llo_original>
// kernel: no_transform_pallas.1
$region0: #{no_transform_pallas.1}
  #allocation0 [shape = 'u32[]', space=smem, size = 0x4, offset = 0x4, fixed_abs, tag = 'smem constant byte address 0x4 - core index']
  #allocation1 [shape = 'u32[144,128]{1,0:T(1,128)}', space=vmem, size = 0x12000, scoped, tag = 'internal scratch']
  #allocation2 [shape = 's32[1]{0}', space=sflag, size = 0x4, scoped, tag = 'scratch operand']
  #allocation3 [shape = 's32[]', space=sflag, size = 0x4, offset = 0, fixed_abs, tag = 'sflag constant byte address 0x0 - dummy sync flag']
  #allocation4 [shape = 'u32[0]{0}', space=smem, size = 0, offset = 0, fixed_abs, tag = 'smem constant byte address 0x0 - null']
  %s0 = inlined_call_operand.hbm [shape: f32[2,4,16,16], index: 0, kind: input, shape index: {}]
  %s1 = inlined_call_operand.hbm [shape: f32[2,4,16,16], index: 1, kind: output, shape index: {}]
  %s2 = sld [smem:[#allocation0]]
  $region2: #{no_transform_pallas.1} parent=0
    _
  %s4 = ssub.s32 1, %s2
  %s5 = scalar_select 0, %s4, %s2
  %s7 = sshll.u32 1, 14
  %s8 = sxor.u32 4294967295, %s7
  %s11 = sshll.u32 3, 24
  %s12 = sxor.u32 4294967295, %s11
  %s13 = sand.u32 0, %s12
  %s15 = sor.u32 %s13, 0
  %18 = dma.general %s0, 2048, %s1, [#allocation2], [#allocation3], [#allocation4], %s15, 0
  %s19 = smul.u32 2, 4
  %s20 = smul.u32 %s19, 16
  %s21 = smul.u32 %s20, 1
  %s22 = sshll.u32 %s21, 4
  %23 = dma.done [#allocation2], %s22
  %24 = vsyncmov [#allocation2]
  %s25 = vpop.sfrf %24
  %p26 = scmp.eq.s32.totalorder %s25, 0
  %p27 = pneg %p26
  %29 = shalt.err (%p27)

</llo_original>
